<compile_context>
chip_gen: v6e
topology: v6e:2x2x1
jax: 0.10.0
libtpu: 0.0.40
codegen_flags: <defaults>
</compile_context>

<pallas_src>
import functools

import jax
import jax.numpy as jnp
from jax.experimental import pallas as pl
from jax.experimental.pallas import tpu as pltpu

_LANES = 128        # lane width (last-dim tile)
_ROW_ALIGN = 16     # bf16 sublane packing; also satisfies f32's 8-row tile
_TB_MAX = 2048      # batch tile cap: ~9 MiB live -> fits default scoped VMEM everywhere
_MIN_SPLIT = 256    # force >=2 grid steps (v7x 2-TC sharding) once batch reaches this


def _round_up(x, m):
    return ((x + m - 1) // m) * m


def _cdiv(a, b):
    return -(-a // b)


def _qnet_kernel(x_ref, w1_ref, b1_ref, w2_ref, b2_ref,
                 w3_ref, b3_ref, w4_ref, b4_ref, o_ref):
    # All matmuls take bf16 MXU inputs with f32 accumulation; bias adds and
    # activations stay in f32.
    x = x_ref[...].astype(jnp.bfloat16)

    # fc1 + LeakyReLU(negative_slope=0.01)
    h1 = jnp.dot(x, w1_ref[...], preferred_element_type=jnp.float32) + b1_ref[...]
    h1 = jnp.maximum(h1, 0.01 * h1)

    # fc2 + ReLU
    h2 = jnp.dot(h1.astype(jnp.bfloat16), w2_ref[...],
                 preferred_element_type=jnp.float32) + b2_ref[...]
    h2 = jnp.maximum(h2, 0.0)

    # fc3 + ReLU
    h3 = jnp.dot(h2.astype(jnp.bfloat16), w3_ref[...],
                 preferred_element_type=jnp.float32) + b3_ref[...]
    h3 = jnp.maximum(h3, 0.0)

    # Dropout1d(p=0.05): identity in eval mode (inference semantics).
    # TODO(synk): training-mode channel dropout (per-row mask) would need pltpu.prng_*.

    # out layer (lane-padded to 128 output columns; pad columns are zero).
    # Stored bf16 to halve the HBM writeback of the padded slab.
    o_ref[...] = (jnp.dot(h3.astype(jnp.bfloat16), w4_ref[...],
                          preferred_element_type=jnp.float32)
                  + b4_ref[...]).astype(o_ref.dtype)


def prepare_params(params):
    """One-time layout prep: torch-style (out,in) weights -> (in,out) bf16,
    biases -> (1,out) f32, and the output layer lane-padded to a multiple of
    128.  Returns (kernel_operands_tuple, action_size)."""
    action_size = params["w_out"].shape[0]
    a_pad = _round_up(action_size, _LANES)

    w1 = params["w_fc1"].T
    w2 = params["w_fc2"].T
    w3 = params["w_fc3"].T
    w4 = jnp.zeros((params["w_out"].shape[1], a_pad), jnp.float32)
    w4 = w4.at[:, :action_size].set(params["w_out"].T)

    b1 = params["b_fc1"].reshape(1, -1)
    b2 = params["b_fc2"].reshape(1, -1)
    b3 = params["b_fc3"].reshape(1, -1)
    b4 = jnp.zeros((1, a_pad), jnp.float32)
    b4 = b4.at[:, :action_size].set(params["b_out"])

    # Weights feed the MXU in bf16 (native path, half the weight DMA); biases
    # stay f32 so the accumulate/add path keeps full precision.
    prepared = (jnp.asarray(w1, jnp.bfloat16), jnp.asarray(b1, jnp.float32),
                jnp.asarray(w2, jnp.bfloat16), jnp.asarray(b2, jnp.float32),
                jnp.asarray(w3, jnp.bfloat16), jnp.asarray(b3, jnp.float32),
                jnp.asarray(w4, jnp.bfloat16), jnp.asarray(b4, jnp.float32))
    return prepared, action_size


@functools.partial(jax.jit, static_argnames=("action_size",))
def qnetwork_forward(x, prepared, action_size):
    """x: (B, state_size) f32.  prepared: output of prepare_params."""
    w1, b1, w2, b2, w3, b3, w4, b4 = prepared
    B, state_size = x.shape
    a_pad = w4.shape[1]

    # Balanced batch tiling: minimize padding for awkward B, keep tiles a
    # multiple of 16 rows, cap at _TB_MAX, and guarantee >=2 grid steps once
    # the batch is large enough so v7x's two TensorCores both get work.
    b_pad_rows = _round_up(max(B, 1), _ROW_ALIGN)
    n_tiles = _cdiv(b_pad_rows, _TB_MAX)
    if n_tiles < 2 and b_pad_rows >= _MIN_SPLIT:
        n_tiles = 2
    tb = _round_up(_cdiv(b_pad_rows, n_tiles), _ROW_ALIGN)
    b_pad = tb * n_tiles
    if b_pad != B:
        x = jnp.pad(x, ((0, b_pad - B), (0, 0)))

    grid = (n_tiles,)
    weight_ops = (w1, b1, w2, b2, w3, b3, w4, b4)

    # x / out are tiled over batch; weights/biases keep a constant block index
    # so Pallas leaves them resident in VMEM across grid steps.
    in_specs = [pl.BlockSpec((tb, state_size), lambda i: (i, 0))]
    in_specs += [pl.BlockSpec(w.shape, lambda i: (0, 0)) for w in weight_ops]
    out_spec = pl.BlockSpec((tb, a_pad), lambda i: (i, 0))

    flops = 2 * b_pad * (state_size * 32 + 32 * 64 + 64 * 512 + 512 * a_pad)
    bytes_accessed = (4 * b_pad * state_size                               # x (f32)
                      + 2 * sum(int(w.size) for w in (w1, w2, w3, w4))     # weights (bf16)
                      + 4 * sum(int(b.size) for b in (b1, b2, b3, b4))     # biases (f32)
                      + 2 * b_pad * a_pad)                                 # out (bf16)
    cost = pl.CostEstimate(flops=flops, transcendentals=0,
                           bytes_accessed=bytes_accessed)

    out = pl.pallas_call(
        _qnet_kernel,
        out_shape=jax.ShapeDtypeStruct((b_pad, a_pad), jnp.bfloat16),
        grid_spec=pltpu.PrefetchScalarGridSpec(
            num_scalar_prefetch=0,
            grid=grid,
            in_specs=in_specs,
            out_specs=out_spec,
        ),
        compiler_params=pltpu.CompilerParams(
            dimension_semantics=("parallel",),
            vmem_limit_bytes=32 << 20),
        cost_estimate=cost,
    )(x, *weight_ops)

    # TODO(synk): packing 32 rows' actions into one 128-lane output row (or
    # fusing the downstream argmax) would further cut writeback + this re-slice.
    return out[:B, :action_size].astype(jnp.float32)


def init_params(key, state_size, action_size):
    """Deterministic PyTorch-style Linear init: U(-1/sqrt(fan_in), 1/sqrt(fan_in))."""
    dims = [(32, state_size), (64, 32), (512, 64), (action_size, 512)]
    names = ["fc1", "fc2", "fc3", "out"]
    params = {}
    for name, (out_f, in_f) in zip(names, dims):
        key, kw, kb = jax.random.split(key, 3)
        bound = 1.0 / (in_f ** 0.5)
        params[f"w_{name}"] = jax.random.uniform(
            kw, (out_f, in_f), jnp.float32, minval=-bound, maxval=bound)
        params[f"b_{name}"] = jax.random.uniform(
            kb, (out_f,), jnp.float32, minval=-bound, maxval=bound)
    return params


def reference_forward(x, params):
    """Pure-JAX f32 reference matching the PyTorch forward (eval mode)."""
    h = x @ params["w_fc1"].T + params["b_fc1"]
    h = jnp.where(h > 0, h, 0.01 * h)
    h = jnp.maximum(h @ params["w_fc2"].T + params["b_fc2"], 0.0)
    h = jnp.maximum(h @ params["w_fc3"].T + params["b_fc3"], 0.0)
    return h @ params["w_out"].T + params["b_out"]


if __name__ == "__main__":
    key = jax.random.PRNGKey(0)
    batch, state_size, action_size = 8, 16, 4

    k_x, k_x2, k_p = jax.random.split(key, 3)
    x = jax.random.normal(k_x, (batch, state_size), jnp.float32)
    params = init_params(k_p, state_size, action_size)
    prepared, a = prepare_params(params)

    out = jax.block_until_ready(qnetwork_forward(x, prepared, a))
    ref = reference_forward(x, params)
    assert out.shape == (batch, action_size), out.shape
    # bf16 MXU inputs + bf16 output store -> loosened tolerance vs f32 reference.
    assert jnp.allclose(out, ref, atol=5e-2, rtol=5e-2), (
        float(jnp.max(jnp.abs(out - ref))))

    # Exercise the batch-padding / tile-selection path (non-multiple-of-16 batch).
    x2 = jax.random.normal(k_x2, (20, state_size), jnp.float32)
    out2 = jax.block_until_ready(qnetwork_forward(x2, prepared, a))
    ref2 = reference_forward(x2, params)
    assert out2.shape == (20, action_size), out2.shape
    assert jnp.allclose(out2, ref2, atol=5e-2, rtol=5e-2), (
        float(jnp.max(jnp.abs(out2 - ref2))))

    print("KERNEL_OK")
</pallas_src>

<mosaic_0001>
module attributes {stable_mosaic.version = 11 : i64} {
  func.func @_qnet_kernel(%arg0: i32, %arg1: memref<16x16xf32, #tpu.memory_space<vmem>>, %arg2: memref<16x32xbf16, #tpu.memory_space<vmem>>, %arg3: memref<1x32xf32, #tpu.memory_space<vmem>>, %arg4: memref<32x64xbf16, #tpu.memory_space<vmem>>, %arg5: memref<1x64xf32, #tpu.memory_space<vmem>>, %arg6: memref<64x512xbf16, #tpu.memory_space<vmem>>, %arg7: memref<1x512xf32, #tpu.memory_space<vmem>>, %arg8: memref<512x128xbf16, #tpu.memory_space<vmem>>, %arg9: memref<1x128xf32, #tpu.memory_space<vmem>>, %arg10: memref<16x128xbf16, #tpu.memory_space<vmem>>) attributes {dimension_semantics = [#tpu.dimension_semantics<parallel>], iteration_bounds = array<i64: 1>, scalar_prefetch = 0 : i64, scratch_operands = 0 : i64, tpu.core_type = #tpu.core_type<tc>, window_params = [{transform_indices = @transform_0, window_bounds = array<i64: 16, 16>}, {pipeline_mode = #tpu.pipeline_mode<synchronous>, transform_indices = @transform_1, window_bounds = array<i64: 16, 32>}, {pipeline_mode = #tpu.pipeline_mode<synchronous>, transform_indices = @transform_2, window_bounds = array<i64: 1, 32>}, {pipeline_mode = #tpu.pipeline_mode<synchronous>, transform_indices = @transform_3, window_bounds = array<i64: 32, 64>}, {pipeline_mode = #tpu.pipeline_mode<synchronous>, transform_indices = @transform_4, window_bounds = array<i64: 1, 64>}, {pipeline_mode = #tpu.pipeline_mode<synchronous>, transform_indices = @transform_5, window_bounds = array<i64: 64, 512>}, {pipeline_mode = #tpu.pipeline_mode<synchronous>, transform_indices = @transform_6, window_bounds = array<i64: 1, 512>}, {pipeline_mode = #tpu.pipeline_mode<synchronous>, transform_indices = @transform_7, window_bounds = array<i64: 512, 128>}, {pipeline_mode = #tpu.pipeline_mode<synchronous>, transform_indices = @transform_8, window_bounds = array<i64: 1, 128>}, {transform_indices = @transform_9, window_bounds = array<i64: 16, 128>}]} {
    %c0 = arith.constant 0 : index
    %c0_0 = arith.constant 0 : index
    %0 = vector.load %arg1[%c0, %c0_0] : memref<16x16xf32, #tpu.memory_space<vmem>>, vector<16x16xf32>
    %1 = arith.truncf %0 : vector<16x16xf32> to vector<16x16xbf16>
    %c0_1 = arith.constant 0 : index
    %c0_2 = arith.constant 0 : index
    %2 = vector.load %arg2[%c0_1, %c0_2] : memref<16x32xbf16, #tpu.memory_space<vmem>>, vector<16x32xbf16>
    %cst = arith.constant dense<0.000000e+00> : vector<16x32xf32>
    %3 = tpu.matmul %1, %2, %cst {dimension_numbers = #tpu.dot_dimension_numbers<[1], [0], [0], [1], [0, 0, 1, 1], [], []>} : vector<16x16xbf16>, vector<16x32xbf16>, vector<16x32xf32> -> vector<16x32xf32>
    %c0_3 = arith.constant 0 : index
    %c0_4 = arith.constant 0 : index
    %4 = vector.load %arg3[%c0_3, %c0_4] : memref<1x32xf32, #tpu.memory_space<vmem>>, vector<1x32xf32>
    %5 = vector.broadcast %4 : vector<1x32xf32> to vector<16x32xf32>
    %6 = arith.addf %3, %5 : vector<16x32xf32>
    %cst_5 = arith.constant 0.00999999977 : f32
    %7 = vector.broadcast %cst_5 : f32 to vector<16x32xf32>
    %8 = arith.mulf %7, %6 : vector<16x32xf32>
    %9 = arith.maximumf %6, %8 : vector<16x32xf32>
    %10 = arith.truncf %9 : vector<16x32xf32> to vector<16x32xbf16>
    %c0_6 = arith.constant 0 : index
    %c0_7 = arith.constant 0 : index
    %11 = vector.load %arg4[%c0_6, %c0_7] : memref<32x64xbf16, #tpu.memory_space<vmem>>, vector<32x64xbf16>
    %cst_8 = arith.constant dense<0.000000e+00> : vector<16x64xf32>
    %12 = tpu.matmul %10, %11, %cst_8 {dimension_numbers = #tpu.dot_dimension_numbers<[1], [0], [0], [1], [0, 0, 1, 1], [], []>} : vector<16x32xbf16>, vector<32x64xbf16>, vector<16x64xf32> -> vector<16x64xf32>
    %c0_9 = arith.constant 0 : index
    %c0_10 = arith.constant 0 : index
    %13 = vector.load %arg5[%c0_9, %c0_10] : memref<1x64xf32, #tpu.memory_space<vmem>>, vector<1x64xf32>
    %14 = vector.broadcast %13 : vector<1x64xf32> to vector<16x64xf32>
    %15 = arith.addf %12, %14 : vector<16x64xf32>
    %cst_11 = arith.constant 0.000000e+00 : f32
    %16 = vector.broadcast %cst_11 : f32 to vector<16x64xf32>
    %17 = arith.maximumf %15, %16 : vector<16x64xf32>
    %18 = arith.truncf %17 : vector<16x64xf32> to vector<16x64xbf16>
    %c0_12 = arith.constant 0 : index
    %c0_13 = arith.constant 0 : index
    %19 = vector.load %arg6[%c0_12, %c0_13] : memref<64x512xbf16, #tpu.memory_space<vmem>>, vector<64x512xbf16>
    %cst_14 = arith.constant dense<0.000000e+00> : vector<16x512xf32>
    %20 = tpu.matmul %18, %19, %cst_14 {dimension_numbers = #tpu.dot_dimension_numbers<[1], [0], [0], [1], [0, 0, 1, 1], [], []>} : vector<16x64xbf16>, vector<64x512xbf16>, vector<16x512xf32> -> vector<16x512xf32>
    %c0_15 = arith.constant 0 : index
    %c0_16 = arith.constant 0 : index
    %21 = vector.load %arg7[%c0_15, %c0_16] : memref<1x512xf32, #tpu.memory_space<vmem>>, vector<1x512xf32>
    %22 = vector.broadcast %21 : vector<1x512xf32> to vector<16x512xf32>
    %23 = arith.addf %20, %22 : vector<16x512xf32>
    %cst_17 = arith.constant 0.000000e+00 : f32
    %24 = vector.broadcast %cst_17 : f32 to vector<16x512xf32>
    %25 = arith.maximumf %23, %24 : vector<16x512xf32>
    %26 = arith.truncf %25 : vector<16x512xf32> to vector<16x512xbf16>
    %c0_18 = arith.constant 0 : index
    %c0_19 = arith.constant 0 : index
    %27 = vector.load %arg8[%c0_18, %c0_19] : memref<512x128xbf16, #tpu.memory_space<vmem>>, vector<512x128xbf16>
    %cst_20 = arith.constant dense<0.000000e+00> : vector<16x128xf32>
    %28 = tpu.matmul %26, %27, %cst_20 {dimension_numbers = #tpu.dot_dimension_numbers<[1], [0], [0], [1], [0, 0, 1, 1], [], []>} : vector<16x512xbf16>, vector<512x128xbf16>, vector<16x128xf32> -> vector<16x128xf32>
    %c0_21 = arith.constant 0 : index
    %c0_22 = arith.constant 0 : index
    %29 = vector.load %arg9[%c0_21, %c0_22] : memref<1x128xf32, #tpu.memory_space<vmem>>, vector<1x128xf32>
    %30 = vector.broadcast %29 : vector<1x128xf32> to vector<16x128xf32>
    %31 = arith.addf %28, %30 : vector<16x128xf32>
    %32 = arith.truncf %31 : vector<16x128xf32> to vector<16x128xbf16>
    %c0_23 = arith.constant 0 : index
    %c0_24 = arith.constant 0 : index
    %33 = vector.load %arg10[%c0_23, %c0_24] : memref<16x128xbf16, #tpu.memory_space<vmem>>, vector<16x128xbf16>
    tpu.vector_store %arg10[%c0_23, %c0_24], %32 {strides = array<i32>} : memref<16x128xbf16, #tpu.memory_space<vmem>>, vector<16x128xbf16>,
    return
  }
  func.func @transform_0(%arg0: i32) -> (i32, i32) {
    %c0_i32 = arith.constant 0 : i32
    %c0_i32_0 = arith.constant 0 : i32
    return %arg0, %c0_i32 : i32, i32
  }
  func.func @transform_1(%arg0: i32) -> (i32, i32) {
    %c0_i32 = arith.constant 0 : i32
    %c0_i32_0 = arith.constant 0 : i32
    %c0_i32_1 = arith.constant 0 : i32
    return %c0_i32, %c0_i32_0 : i32, i32
  }
  func.func @transform_2(%arg0: i32) -> (i32, i32) {
    %c0_i32 = arith.constant 0 : i32
    %c0_i32_0 = arith.constant 0 : i32
    %c0_i32_1 = arith.constant 0 : i32
    return %c0_i32, %c0_i32_0 : i32, i32
  }
  func.func @transform_3(%arg0: i32) -> (i32, i32) {
    %c0_i32 = arith.constant 0 : i32
    %c0_i32_0 = arith.constant 0 : i32
    %c0_i32_1 = arith.constant 0 : i32
    return %c0_i32, %c0_i32_0 : i32, i32
  }
  func.func @transform_4(%arg0: i32) -> (i32, i32) {
    %c0_i32 = arith.constant 0 : i32
    %c0_i32_0 = arith.constant 0 : i32
    %c0_i32_1 = arith.constant 0 : i32
    return %c0_i32, %c0_i32_0 : i32, i32
  }
  func.func @transform_5(%arg0: i32) -> (i32, i32) {
    %c0_i32 = arith.constant 0 : i32
    %c0_i32_0 = arith.constant 0 : i32
    %c0_i32_1 = arith.constant 0 : i32
    return %c0_i32, %c0_i32_0 : i32, i32
  }
  func.func @transform_6(%arg0: i32) -> (i32, i32) {
    %c0_i32 = arith.constant 0 : i32
    %c0_i32_0 = arith.constant 0 : i32
    %c0_i32_1 = arith.constant 0 : i32
    return %c0_i32, %c0_i32_0 : i32, i32
  }
  func.func @transform_7(%arg0: i32) -> (i32, i32) {
    %c0_i32 = arith.constant 0 : i32
    %c0_i32_0 = arith.constant 0 : i32
    %c0_i32_1 = arith.constant 0 : i32
    return %c0_i32, %c0_i32_0 : i32, i32
  }
  func.func @transform_8(%arg0: i32) -> (i32, i32) {
    %c0_i32 = arith.constant 0 : i32
    %c0_i32_0 = arith.constant 0 : i32
    %c0_i32_1 = arith.constant 0 : i32
    return %c0_i32, %c0_i32_0 : i32, i32
  }
  func.func @transform_9(%arg0: i32) -> (i32, i32) {
    %c0_i32 = arith.constant 0 : i32
    %c0_i32_0 = arith.constant 0 : i32
    return %arg0, %c0_i32 : i32, i32
  }
}

</mosaic_0001>

<llo_original>
// kernel: qnetwork_forward.1
$region0: #{qnetwork_forward.1}
  #allocation0 [shape = 'u32[]', space=smem, size = 0x4, offset = 0x4, fixed_abs, tag = 'smem constant byte address 0x4 - core index']
  #allocation1 [shape = 'u32[144,128]{1,0:T(1,128)}', space=vmem, size = 0x12000, scoped, tag = 'internal scratch']
  %s0 = inlined_call_operand.vmem [shape: f32[16,16], index: 0, kind: input, shape index: {}]
  %s1 = inlined_call_operand.vmem [shape: bf16[16,32], index: 1, kind: input, shape index: {}]
  %s2 = inlined_call_operand.vmem [shape: f32[1,32], index: 2, kind: input, shape index: {}]
  %s3 = inlined_call_operand.vmem [shape: bf16[32,64], index: 3, kind: input, shape index: {}]
  %s4 = inlined_call_operand.vmem [shape: f32[1,64], index: 4, kind: input, shape index: {}]
  %s5 = inlined_call_operand.hbm [shape: bf16[64,512], index: 5, kind: input, shape index: {}]
  %s6 = inlined_call_operand.vmem [shape: f32[1,512], index: 6, kind: input, shape index: {}]
  %s7 = inlined_call_operand.hbm [shape: bf16[512,128], index: 7, kind: input, shape index: {}]
  %s8 = inlined_call_operand.vmem [shape: f32[1,128], index: 8, kind: input, shape index: {}]
  %s9 = inlined_call_operand.vmem [shape: bf16[16,128], index: 9, kind: output, shape index: {}]
  %s10 = sld [smem:[#allocation0]]
  $region54: #{qnetwork_forward.1} parent=0
    _
  %s12 = ssub.s32 1, %s10
  %s13 = scalar_select 0, %s12, %s10
  $region1: #{qnetwork_forward.1} parent=0
    #allocation2 [shape = 'u8[65536]{0}', space=vmem, size = 0x10000, scoped, tag = 'input window, operand 5, single buffered']
    #allocation3 [shape = 's32[1]{0}', space=sflag, size = 0x4, scoped, tag = 'scoped memory for qnetwork_forward.1']
    #allocation4 [shape = 'u8[131072]{0}', space=vmem, size = 0x20000, scoped, tag = 'input window, operand 7, single buffered']
    #allocation5 [shape = 's32[1]{0}', space=sflag, size = 0x4, scoped, tag = 'scoped memory for qnetwork_forward.1']
    %14 = vsyncpa [#allocation3], 0
    %15 = vsyncpa [#allocation5], 0
    // Predicated region
    $region2: #{qnetwork_forward.1} parent=1 // pred_check
      _
    $region3: #{qnetwork_forward.1} parent=1 // pred_check_branch
      %17 = sbr.rel (0) target = $region5
    $region4: #{qnetwork_forward.1} parent=1 // pred_region
      _
    $region5: #{qnetwork_forward.1} parent=1 // pred_fallthru
      _
    // Predicated region
    $region6: #{qnetwork_forward.1} parent=1 // pred_check
      _
    $region7: #{qnetwork_forward.1} parent=1 // pred_check_branch
      %19 = sbr.rel (0) target = $region9
    $region8: #{qnetwork_forward.1} parent=1 // pred_region
      _
    $region9: #{qnetwork_forward.1} parent=1 // pred_fallthru
      _
    // Predicated region
    $region10: #{qnetwork_forward.1} parent=1 // pred_check
      _
    $region11: #{qnetwork_forward.1} parent=1 // pred_check_branch
      %21 = sbr.rel (0) target = $region13
    $region12: #{qnetwork_forward.1} parent=1 // pred_region
      _
    $region13: #{qnetwork_forward.1} parent=1 // pred_fallthru
      _
    // Predicated region
    $region14: #{qnetwork_forward.1} parent=1 // pred_check
      _
    $region15: #{qnetwork_forward.1} parent=1 // pred_check_branch
      %23 = sbr.rel (0) target = $region17
    $region16: #{qnetwork_forward.1} parent=1 // pred_region
      _
    $region17: #{qnetwork_forward.1} parent=1 // pred_fallthru
      _
    // Predicated region
    $region18: #{qnetwork_forward.1} parent=1 // pred_check
      _
    $region19: #{qnetwork_forward.1} parent=1 // pred_check_branch
      %25 = sbr.rel (0) target = $region21
    $region20: #{qnetwork_forward.1} parent=1 // pred_region
      _
    $region21: #{qnetwork_forward.1} parent=1 // pred_fallthru
      _
    // Predicated region
    $region22: #{qnetwork_forward.1} parent=1 // pred_check
      _
    $region23: #{qnetwork_forward.1} parent=1 // pred_check_branch
      %27 = sbr.rel (0) target = $region25
    $region24: #{qnetwork_forward.1} parent=1 // pred_region
      %s29 = ssub.s32 2048, 2048
      %30 = vsyncadd [#allocation3], %s29
      %s31 = sshll.u32 [#allocation2], 4
      %s32 = int_to_ptr.vmem [resolvable:$true] %s31
      %37 = dma.hbm_to_vmem [thread:$0]  %s5, 2048, %s32, [#allocation3], 256, 256, 16
    $region25: #{qnetwork_forward.1} parent=1 // pred_fallthru
      _
    // Predicated region
    $region26: #{qnetwork_forward.1} parent=1 // pred_check
      _
    $region27: #{qnetwork_forward.1} parent=1 // pred_check_branch
      %39 = sbr.rel (0) target = $region29
    $region28: #{qnetwork_forward.1} parent=1 // pred_region
      _
    $region29: #{qnetwork_forward.1} parent=1 // pred_fallthru
      _
    // Predicated region
    $region30: #{qnetwork_forward.1} parent=1 // pred_check
      _
    $region31: #{qnetwork_forward.1} parent=1 // pred_check_branch
      %41 = sbr.rel (0) target = $region33
    $region32: #{qnetwork_forward.1} parent=1 // pred_region
      %s43 = ssub.s32 4096, 4096
      %44 = vsyncadd [#allocation5], %s43
      %s45 = sshll.u32 [#allocation4], 4
      %s46 = int_to_ptr.vmem [resolvable:$true] %s45
      %51 = dma.hbm_to_vmem [thread:$0]  %s7, 4096, %s46, [#allocation5], 64, 64, 4
    $region33: #{qnetwork_forward.1} parent=1 // pred_fallthru
      _
    // Predicated region
    $region34: #{qnetwork_forward.1} parent=1 // pred_check
      _
    $region35: #{qnetwork_forward.1} parent=1 // pred_check_branch
      %53 = sbr.rel (0) target = $region37
    $region36: #{qnetwork_forward.1} parent=1 // pred_region
      _
    $region37: #{qnetwork_forward.1} parent=1 // pred_fallthru
      _
    // Predicated region
    $region38: #{qnetwork_forward.1} parent=1 // pred_check
      _
    $region39: #{qnetwork_forward.1} parent=1 // pred_check_branch
      %55 = sbr.rel (0) target = $region41
    $region40: #{qnetwork_forward.1} parent=1 // pred_region
      %56 = dma.done [#allocation3], 2048
    $region41: #{qnetwork_forward.1} parent=1 // pred_fallthru
      _
    // Predicated region
    $region42: #{qnetwork_forward.1} parent=1 // pred_check
      _
    $region43: #{qnetwork_forward.1} parent=1 // pred_check_branch
      %58 = sbr.rel (0) target = $region45
    $region44: #{qnetwork_forward.1} parent=1 // pred_region
      %59 = dma.done [#allocation5], 4096
    $region45: #{qnetwork_forward.1} parent=1 // pred_fallthru
      _
    %v61 = vld [vmem:[%s0] sm:$0xff]
    %v62 = vld [vmem:[%s0 + $0x8] sm:$0xff]
    %v63 = vpack.c.bf16 %v62, %v61
    %v64 = vld [vmem:[%s1] sm:$0xf]
    %v65 = vld [vmem:[%s1 + $0x4] sm:$0xf]
    %v66 = vld [vmem:[%s2] sm:$0x1]
    %v68 = vlaneseq
    %v69 = vshrl.u32 %v68, 7
    %v70 = vsub.s32 0, %v69
    %v71 = vrot.slane %v66, %v70
    %v75 = vunpack.c.l.b16 %v64
    %v76 = vunpack.c.l.b16 %v65
    %v77 = vpack.c.b16 %v76, %v75
    %vm79 = vcmask 130048
    %v81 = vsel %vm79, %v63, 0
    %83 = vmatprep.subr.bf16.mxu0 0
    %84 = vmatpush1.bf16.msra.mxu0 0
    %85 = vmatprep.subr.bf16.mxu0 0
    %86 = vmatpush1.bf16.msra.mxu0 0
    %87 = vmatprep.subr.bf16.mxu0 0
    %88 = vmatpush1.bf16.msra.mxu0 0
    %89 = vmatprep.subr.bf16.mxu0 0
    %90 = vmatpush1.bf16.msra.mxu0 0
    %91 = vmatprep.subr.bf16.mxu0 0
    %92 = vmatpush1.bf16.msra.mxu0 0
    %93 = vmatprep.subr.bf16.mxu0 0
    %94 = vmatpush1.bf16.msra.mxu0 0
    %95 = vmatprep.subr.bf16.mxu0 0
    %96 = vmatpush1.bf16.msra.mxu0 0
    %97 = vmatprep.subr.bf16.mxu0 0
    %98 = vmatpush1.bf16.msra.mxu0 %v77
    %99 = vmatprep.subr.bf16.mxu0 0
    %100 = vmatpush2.bf16.msra.mxu0 0
    %101 = vmatprep.subr.bf16.mxu0 0
    %102 = vmatpush2.bf16.msra.mxu0 0
    %103 = vmatprep.subr.bf16.mxu0 0
    %104 = vmatpush2.bf16.msra.mxu0 0
    %105 = vmatprep.subr.bf16.mxu0 0
    %106 = vmatpush2.bf16.msra.mxu0 0
    %107 = vmatprep.subr.bf16.mxu0 0
    %108 = vmatpush2.bf16.msra.mxu0 0
    %109 = vmatprep.subr.bf16.mxu0 0
    %110 = vmatpush2.bf16.msra.mxu0 0
    %111 = vmatprep.subr.bf16.mxu0 0
    %112 = vmatpush2.bf16.msra.mxu0 0
    %113 = vmatprep.subr.bf16.mxu0 0
    %114 = vmatpush2.bf16.msra.mxu0 0
    %115 = vmatprep.mubr.bf16.mxu0 0
    %116 = vmatmul.mubr.bf16.gmra.mxu0 %v81
    %v117 = vpop.f32.mrf.mxu0
    %v118 = vadd.f32 %v71, %v117
    %v119 = vpop.f32.mrf.mxu0
    %v120 = vpop.f32.mrf.mxu0
    %v121 = vadd.f32 %v71, %v120
    %v122 = vpop.f32.mrf.mxu0
    %123 = vdwg.mxu0
    %v124 = vmul.f32 %v118, 0.01
    %v125 = vmul.f32 %v121, 0.01
    %v126 = vmax.f32 %v118, %v124
    %v127 = vmax.f32 %v121, %v125
    %v128 = vpack.c.bf16 %v127, %v126
    %v129 = vld [vmem:[%s3] sm:$0xf]
    %v130 = vld [vmem:[%s3 + $0x4] sm:$0xf]
    %v131 = vld [vmem:[%s3 + $0x8] sm:$0xf]
    %v132 = vld [vmem:[%s3 + $0xc] sm:$0xf]
    %v133 = vld [vmem:[%s4] sm:$0x1]
    %v135 = vlaneseq
    %v136 = vshrl.u32 %v135, 7
    %v137 = vsub.s32 0, %v136
    %v138 = vrot.slane %v133, %v137
    %v144 = vunpack.c.l.b16 %v129
    %v145 = vunpack.c.l.b16 %v130
    %v146 = vunpack.c.l.b16 %v131
    %v147 = vunpack.c.l.b16 %v132
    %v148 = vpack.c.b16 %v145, %v144
    %v149 = vpack.c.b16 %v147, %v146
    %vm152 = vcmask 261120
    %v154 = vsel %vm152, %v128, 0
    %156 = vmatprep.subr.bf16.mxu0 0
    %157 = vmatpush1.bf16.msra.mxu0 0
    %158 = vmatprep.subr.bf16.mxu0 0
    %159 = vmatpush1.bf16.msra.mxu0 0
    %160 = vmatprep.subr.bf16.mxu0 0
    %161 = vmatpush1.bf16.msra.mxu0 0
    %162 = vmatprep.subr.bf16.mxu0 0
    %163 = vmatpush1.bf16.msra.mxu0 0
    %164 = vmatprep.subr.bf16.mxu0 0
    %165 = vmatpush1.bf16.msra.mxu0 0
    %166 = vmatprep.subr.bf16.mxu0 0
    %167 = vmatpush1.bf16.msra.mxu0 0
    %168 = vmatprep.subr.bf16.mxu0 0
    %169 = vmatpush1.bf16.msra.mxu0 %v149
    %170 = vmatprep.subr.bf16.mxu0 0
    %171 = vmatpush1.bf16.msra.mxu0 %v148
    %172 = vmatprep.subr.bf16.mxu0 0
    %173 = vmatpush2.bf16.msra.mxu0 0
    %174 = vmatprep.subr.bf16.mxu0 0
    %175 = vmatpush2.bf16.msra.mxu0 0
    %176 = vmatprep.subr.bf16.mxu0 0
    %177 = vmatpush2.bf16.msra.mxu0 0
    %178 = vmatprep.subr.bf16.mxu0 0
    %179 = vmatpush2.bf16.msra.mxu0 0
    %180 = vmatprep.subr.bf16.mxu0 0
    %181 = vmatpush2.bf16.msra.mxu0 0
    %182 = vmatprep.subr.bf16.mxu0 0
    %183 = vmatpush2.bf16.msra.mxu0 0
    %184 = vmatprep.subr.bf16.mxu0 0
    %185 = vmatpush2.bf16.msra.mxu0 0
    %186 = vmatprep.subr.bf16.mxu0 0
    %187 = vmatpush2.bf16.msra.mxu0 0
    %188 = vmatprep.mubr.bf16.mxu0 0
    %189 = vmatmul.mubr.bf16.gmra.mxu0 %v154
    %v190 = vpop.f32.mrf.mxu0
    %v191 = vadd.f32 %v138, %v190
    %v192 = vpop.f32.mrf.mxu0
    %v193 = vpop.f32.mrf.mxu0
    %v194 = vadd.f32 %v138, %v193
    %v195 = vpop.f32.mrf.mxu0
    %196 = vdwg.mxu0
    %v197 = vmax.f32 %v191, 0.0
    %v198 = vmax.f32 %v194, 0.0
    %v199 = vpack.c.bf16 %v198, %v197
    %v200 = vld [vmem:[#allocation2] sm:$0xff]
    %v201 = vld [vmem:[#allocation2 + $0x8] sm:$0xff]
    %v202 = vld [vmem:[#allocation2 + $0x10] sm:$0xff]
    %v203 = vld [vmem:[#allocation2 + $0x18] sm:$0xff]
    %v204 = vld [vmem:[#allocation2 + $0x20] sm:$0xff]
    %v205 = vld [vmem:[#allocation2 + $0x28] sm:$0xff]
    %v206 = vld [vmem:[#allocation2 + $0x30] sm:$0xff]
    %v207 = vld [vmem:[#allocation2 + $0x38] sm:$0xff]
    %v208 = vld [vmem:[#allocation2 + $0x40] sm:$0xff]
    %v209 = vld [vmem:[#allocation2 + $0x48] sm:$0xff]
    %v210 = vld [vmem:[#allocation2 + $0x50] sm:$0xff]
    %v211 = vld [vmem:[#allocation2 + $0x58] sm:$0xff]
    %v212 = vld [vmem:[#allocation2 + $0x60] sm:$0xff]
    %v213 = vld [vmem:[#allocation2 + $0x68] sm:$0xff]
    %v214 = vld [vmem:[#allocation2 + $0x70] sm:$0xff]
    %v215 = vld [vmem:[#allocation2 + $0x78] sm:$0xff]
    %v216 = vld [vmem:[%s6] sm:$0xf]
    %v218 = vlaneseq
    %v219 = vshrl.u32 %v218, 7
    %v220 = vsub.s32 0, %v219
    %v221 = vrot.slane %v216, %v220
    %v222 = vlaneseq
    %v223 = vshrl.u32 %v222, 7
    %v224 = vsub.s32 1, %v223
    %v225 = vrot.slane %v216, %v224
    %v226 = vlaneseq
    %v227 = vshrl.u32 %v226, 7
    %v228 = vsub.s32 2, %v227
    %v229 = vrot.slane %v216, %v228
    %v230 = vlaneseq
    %v231 = vshrl.u32 %v230, 7
    %v232 = vsub.s32 3, %v231
    %v233 = vrot.slane %v216, %v232
    %v254 = vunpack.c.l.b16 %v200
    %v255 = vunpack.c.h.b16 %v200
    %v256 = vunpack.c.l.b16 %v201
    %v257 = vunpack.c.h.b16 %v201
    %v258 = vunpack.c.l.b16 %v202
    %v259 = vunpack.c.h.b16 %v202
    %v260 = vunpack.c.l.b16 %v203
    %v261 = vunpack.c.h.b16 %v203
    %v262 = vunpack.c.l.b16 %v204
    %v263 = vunpack.c.h.b16 %v204
    %v264 = vunpack.c.l.b16 %v205
    %v265 = vunpack.c.h.b16 %v205
    %v266 = vunpack.c.l.b16 %v206
    %v267 = vunpack.c.h.b16 %v206
    %v268 = vunpack.c.l.b16 %v207
    %v269 = vunpack.c.h.b16 %v207
    %v270 = vunpack.c.l.b16 %v208
    %v271 = vunpack.c.h.b16 %v208
    %v272 = vunpack.c.l.b16 %v209
    %v273 = vunpack.c.h.b16 %v209
    %v274 = vunpack.c.l.b16 %v210
    %v275 = vunpack.c.h.b16 %v210
    %v276 = vunpack.c.l.b16 %v211
    %v277 = vunpack.c.h.b16 %v211
    %v278 = vunpack.c.l.b16 %v212
    %v279 = vunpack.c.h.b16 %v212
    %v280 = vunpack.c.l.b16 %v213
    %v281 = vunpack.c.h.b16 %v213
    %v282 = vunpack.c.l.b16 %v214
    %v283 = vunpack.c.h.b16 %v214
    %v284 = vunpack.c.l.b16 %v215
    %v285 = vunpack.c.h.b16 %v215
    %v286 = vpack.c.b16 %v258, %v254
    %v287 = vpack.c.b16 %v259, %v255
    %v288 = vpack.c.b16 %v260, %v256
    %v289 = vpack.c.b16 %v261, %v257
    %v290 = vpack.c.b16 %v266, %v262
    %v291 = vpack.c.b16 %v267, %v263
    %v292 = vpack.c.b16 %v268, %v264
    %v293 = vpack.c.b16 %v269, %v265
    %v294 = vpack.c.b16 %v274, %v270
    %v295 = vpack.c.b16 %v275, %v271
    %v296 = vpack.c.b16 %v276, %v272
    %v297 = vpack.c.b16 %v277, %v273
    %v298 = vpack.c.b16 %v282, %v278
    %v299 = vpack.c.b16 %v283, %v279
    %v300 = vpack.c.b16 %v284, %v280
    %v301 = vpack.c.b16 %v285, %v281
    %vm318 = vcmask 523264
    %v320 = vsel %vm318, %v199, 0
    %322 = vmatprep.subr.bf16.mxu0 0
    %323 = vmatpush1.bf16.msra.mxu0 0
    %324 = vmatprep.subr.bf16.mxu0 0
    %325 = vmatpush1.bf16.msra.mxu0 0
    %326 = vmatprep.subr.bf16.mxu0 0
    %327 = vmatpush1.bf16.msra.mxu0 0
    %328 = vmatprep.subr.bf16.mxu0 0
    %329 = vmatpush1.bf16.msra.mxu0 0
    %330 = vmatprep.subr.bf16.mxu0 %v299
    %331 = vmatpush1.bf16.msra.mxu0 %v298
    %332 = vmatprep.subr.bf16.mxu0 %v295
    %333 = vmatpush1.bf16.msra.mxu0 %v294
    %334 = vmatprep.subr.bf16.mxu0 %v291
    %335 = vmatpush1.bf16.msra.mxu0 %v290
    %336 = vmatprep.subr.bf16.mxu0 %v287
    %337 = vmatpush1.bf16.msra.mxu0 %v286
    %338 = vmatprep.subr.bf16.mxu0 0
    %339 = vmatpush2.bf16.msra.mxu0 0
    %340 = vmatprep.subr.bf16.mxu0 0
    %341 = vmatpush2.bf16.msra.mxu0 0
    %342 = vmatprep.subr.bf16.mxu0 0
    %343 = vmatpush2.bf16.msra.mxu0 0
    %344 = vmatprep.subr.bf16.mxu0 0
    %345 = vmatpush2.bf16.msra.mxu0 0
    %346 = vmatprep.subr.bf16.mxu0 0
    %347 = vmatpush2.bf16.msra.mxu0 0
    %348 = vmatprep.subr.bf16.mxu0 0
    %349 = vmatpush2.bf16.msra.mxu0 0
    %350 = vmatprep.subr.bf16.mxu0 0
    %351 = vmatpush2.bf16.msra.mxu0 0
    %352 = vmatprep.subr.bf16.mxu0 0
    %353 = vmatpush2.bf16.msra.mxu0 0
    %354 = vmatprep.mubr.bf16.mxu0 0
    %355 = vmatmul.mubr.bf16.gmra.mxu0 %v320
    %v356 = vpop.f32.mrf.mxu0
    %v357 = vadd.f32 %v221, %v356
    %v358 = vpop.f32.mrf.mxu0
    %v359 = vadd.f32 %v225, %v358
    %v360 = vpop.f32.mrf.mxu0
    %v361 = vadd.f32 %v221, %v360
    %v362 = vpop.f32.mrf.mxu0
    %v363 = vadd.f32 %v225, %v362
    %364 = vdwg.mxu0
    %365 = vmatprep.subr.bf16.mxu0 0
    %366 = vmatpush1.bf16.msra.mxu0 0
    %367 = vmatprep.subr.bf16.mxu0 0
    %368 = vmatpush1.bf16.msra.mxu0 0
    %369 = vmatprep.subr.bf16.mxu0 0
    %370 = vmatpush1.bf16.msra.mxu0 0
    %371 = vmatprep.subr.bf16.mxu0 0
    %372 = vmatpush1.bf16.msra.mxu0 0
    %373 = vmatprep.subr.bf16.mxu0 %v301
    %374 = vmatpush1.bf16.msra.mxu0 %v300
    %375 = vmatprep.subr.bf16.mxu0 %v297
    %376 = vmatpush1.bf16.msra.mxu0 %v296
    %377 = vmatprep.subr.bf16.mxu0 %v293
    %378 = vmatpush1.bf16.msra.mxu0 %v292
    %379 = vmatprep.subr.bf16.mxu0 %v289
    %380 = vmatpush1.bf16.msra.mxu0 %v288
    %381 = vmatprep.subr.bf16.mxu0 0
    %382 = vmatpush2.bf16.msra.mxu0 0
    %383 = vmatprep.subr.bf16.mxu0 0
    %384 = vmatpush2.bf16.msra.mxu0 0
    %385 = vmatprep.subr.bf16.mxu0 0
    %386 = vmatpush2.bf16.msra.mxu0 0
    %387 = vmatprep.subr.bf16.mxu0 0
    %388 = vmatpush2.bf16.msra.mxu0 0
    %389 = vmatprep.subr.bf16.mxu0 0
    %390 = vmatpush2.bf16.msra.mxu0 0
    %391 = vmatprep.subr.bf16.mxu0 0
    %392 = vmatpush2.bf16.msra.mxu0 0
    %393 = vmatprep.subr.bf16.mxu0 0
    %394 = vmatpush2.bf16.msra.mxu0 0
    %395 = vmatprep.subr.bf16.mxu0 0
    %396 = vmatpush2.bf16.msra.mxu0 0
    %397 = vmatprep.mubr.bf16.mxu0 0
    %398 = vmatmul.mubr.bf16.gmra.mxu0 %v320
    %v399 = vpop.f32.mrf.mxu0
    %v400 = vadd.f32 %v229, %v399
    %v401 = vpop.f32.mrf.mxu0
    %v402 = vadd.f32 %v233, %v401
    %v403 = vpop.f32.mrf.mxu0
    %v404 = vadd.f32 %v229, %v403
    %v405 = vpop.f32.mrf.mxu0
    %v406 = vadd.f32 %v233, %v405
    %407 = vdwg.mxu0
    %v408 = vmax.f32 %v357, 0.0
    %v409 = vmax.f32 %v359, 0.0
    %v410 = vmax.f32 %v400, 0.0
    %v411 = vmax.f32 %v402, 0.0
    %v412 = vmax.f32 %v361, 0.0
    %v413 = vmax.f32 %v363, 0.0
    %v414 = vmax.f32 %v404, 0.0
    %v415 = vmax.f32 %v406, 0.0
    %v416 = vpack.c.bf16 %v412, %v408
    %v417 = vpack.c.bf16 %v413, %v409
    %v418 = vpack.c.bf16 %v414, %v410
    %v419 = vpack.c.bf16 %v415, %v411
    %v420 = vld [vmem:[#allocation4] sm:$0xf]
    %v421 = vld [vmem:[#allocation4 + $0x4] sm:$0xf]
    %v422 = vld [vmem:[#allocation4 + $0x8] sm:$0xf]
    %v423 = vld [vmem:[#allocation4 + $0xc] sm:$0xf]
    %v424 = vld [vmem:[#allocation4 + $0x10] sm:$0xf]
    %v425 = vld [vmem:[#allocation4 + $0x14] sm:$0xf]
    %v426 = vld [vmem:[#allocation4 + $0x18] sm:$0xf]
    %v427 = vld [vmem:[#allocation4 + $0x1c] sm:$0xf]
    %v428 = vld [vmem:[#allocation4 + $0x20] sm:$0xf]
    %v429 = vld [vmem:[#allocation4 + $0x24] sm:$0xf]
    %v430 = vld [vmem:[#allocation4 + $0x28] sm:$0xf]
    %v431 = vld [vmem:[#allocation4 + $0x2c] sm:$0xf]
    %v432 = vld [vmem:[#allocation4 + $0x30] sm:$0xf]
    %v433 = vld [vmem:[#allocation4 + $0x34] sm:$0xf]
    %v434 = vld [vmem:[#allocation4 + $0x38] sm:$0xf]
    %v435 = vld [vmem:[#allocation4 + $0x3c] sm:$0xf]
    %v436 = vld [vmem:[#allocation4 + $0x40] sm:$0xf]
    %v437 = vld [vmem:[#allocation4 + $0x44] sm:$0xf]
    %v438 = vld [vmem:[#allocation4 + $0x48] sm:$0xf]
    %v439 = vld [vmem:[#allocation4 + $0x4c] sm:$0xf]
    %v440 = vld [vmem:[#allocation4 + $0x50] sm:$0xf]
    %v441 = vld [vmem:[#allocation4 + $0x54] sm:$0xf]
    %v442 = vld [vmem:[#allocation4 + $0x58] sm:$0xf]
    %v443 = vld [vmem:[#allocation4 + $0x5c] sm:$0xf]
    %v444 = vld [vmem:[#allocation4 + $0x60] sm:$0xf]
    %v445 = vld [vmem:[#allocation4 + $0x64] sm:$0xf]
    %v446 = vld [vmem:[#allocation4 + $0x68] sm:$0xf]
    %v447 = vld [vmem:[#allocation4 + $0x6c] sm:$0xf]
    %v448 = vld [vmem:[#allocation4 + $0x70] sm:$0xf]
    %v449 = vld [vmem:[#allocation4 + $0x74] sm:$0xf]
    %v450 = vld [vmem:[#allocation4 + $0x78] sm:$0xf]
    %v451 = vld [vmem:[#allocation4 + $0x7c] sm:$0xf]
    %v452 = vld [vmem:[#allocation4 + $0x80] sm:$0xf]
    %v453 = vld [vmem:[#allocation4 + $0x84] sm:$0xf]
    %v454 = vld [vmem:[#allocation4 + $0x88] sm:$0xf]
    %v455 = vld [vmem:[#allocation4 + $0x8c] sm:$0xf]
    %v456 = vld [vmem:[#allocation4 + $0x90] sm:$0xf]
    %v457 = vld [vmem:[#allocation4 + $0x94] sm:$0xf]
    %v458 = vld [vmem:[#allocation4 + $0x98] sm:$0xf]
    %v459 = vld [vmem:[#allocation4 + $0x9c] sm:$0xf]
    %v460 = vld [vmem:[#allocation4 + $0xa0] sm:$0xf]
    %v461 = vld [vmem:[#allocation4 + $0xa4] sm:$0xf]
    %v462 = vld [vmem:[#allocation4 + $0xa8] sm:$0xf]
    %v463 = vld [vmem:[#allocation4 + $0xac] sm:$0xf]
    %v464 = vld [vmem:[#allocation4 + $0xb0] sm:$0xf]
    %v465 = vld [vmem:[#allocation4 + $0xb4] sm:$0xf]
    %v466 = vld [vmem:[#allocation4 + $0xb8] sm:$0xf]
    %v467 = vld [vmem:[#allocation4 + $0xbc] sm:$0xf]
    %v468 = vld [vmem:[#allocation4 + $0xc0] sm:$0xf]
    %v469 = vld [vmem:[#allocation4 + $0xc4] sm:$0xf]
    %v470 = vld [vmem:[#allocation4 + $0xc8] sm:$0xf]
    %v471 = vld [vmem:[#allocation4 + $0xcc] sm:$0xf]
    %v472 = vld [vmem:[#allocation4 + $0xd0] sm:$0xf]
    %v473 = vld [vmem:[#allocation4 + $0xd4] sm:$0xf]
    %v474 = vld [vmem:[#allocation4 + $0xd8] sm:$0xf]
    %v475 = vld [vmem:[#allocation4 + $0xdc] sm:$0xf]
    %v476 = vld [vmem:[#allocation4 + $0xe0] sm:$0xf]
    %v477 = vld [vmem:[#allocation4 + $0xe4] sm:$0xf]
    %v478 = vld [vmem:[#allocation4 + $0xe8] sm:$0xf]
    %v479 = vld [vmem:[#allocation4 + $0xec] sm:$0xf]
    %v480 = vld [vmem:[#allocation4 + $0xf0] sm:$0xf]
    %v481 = vld [vmem:[#allocation4 + $0xf4] sm:$0xf]
    %v482 = vld [vmem:[#allocation4 + $0xf8] sm:$0xf]
    %v483 = vld [vmem:[#allocation4 + $0xfc] sm:$0xf]
    %v484 = vld [vmem:[%s8] sm:$0x1]
    %v486 = vlaneseq
    %v487 = vshrl.u32 %v486, 7
    %v488 = vsub.s32 0, %v487
    %v489 = vrot.slane %v484, %v488
    %v555 = vunpack.c.l.b16 %v420
    %v556 = vunpack.c.l.b16 %v421
    %v557 = vunpack.c.l.b16 %v422
    %v558 = vunpack.c.l.b16 %v423
    %v559 = vunpack.c.l.b16 %v424
    %v560 = vunpack.c.l.b16 %v425
    %v561 = vunpack.c.l.b16 %v426
    %v562 = vunpack.c.l.b16 %v427
    %v563 = vunpack.c.l.b16 %v428
    %v564 = vunpack.c.l.b16 %v429
    %v565 = vunpack.c.l.b16 %v430
    %v566 = vunpack.c.l.b16 %v431
    %v567 = vunpack.c.l.b16 %v432
    %v568 = vunpack.c.l.b16 %v433
    %v569 = vunpack.c.l.b16 %v434
    %v570 = vunpack.c.l.b16 %v435
    %v571 = vunpack.c.l.b16 %v436
    %v572 = vunpack.c.l.b16 %v437
    %v573 = vunpack.c.l.b16 %v438
    %v574 = vunpack.c.l.b16 %v439
    %v575 = vunpack.c.l.b16 %v440
    %v576 = vunpack.c.l.b16 %v441
    %v577 = vunpack.c.l.b16 %v442
    %v578 = vunpack.c.l.b16 %v443
    %v579 = vunpack.c.l.b16 %v444
    %v580 = vunpack.c.l.b16 %v445
    %v581 = vunpack.c.l.b16 %v446
    %v582 = vunpack.c.l.b16 %v447
    %v583 = vunpack.c.l.b16 %v448
    %v584 = vunpack.c.l.b16 %v449
    %v585 = vunpack.c.l.b16 %v450
    %v586 = vunpack.c.l.b16 %v451
    %v587 = vunpack.c.l.b16 %v452
    %v588 = vunpack.c.l.b16 %v453
    %v589 = vunpack.c.l.b16 %v454
    %v590 = vunpack.c.l.b16 %v455
    %v591 = vunpack.c.l.b16 %v456
    %v592 = vunpack.c.l.b16 %v457
    %v593 = vunpack.c.l.b16 %v458
    %v594 = vunpack.c.l.b16 %v459
    %v595 = vunpack.c.l.b16 %v460
    %v596 = vunpack.c.l.b16 %v461
    %v597 = vunpack.c.l.b16 %v462
    %v598 = vunpack.c.l.b16 %v463
    %v599 = vunpack.c.l.b16 %v464
    %v600 = vunpack.c.l.b16 %v465
    %v601 = vunpack.c.l.b16 %v466
    %v602 = vunpack.c.l.b16 %v467
    %v603 = vunpack.c.l.b16 %v468
    %v604 = vunpack.c.l.b16 %v469
    %v605 = vunpack.c.l.b16 %v470
    %v606 = vunpack.c.l.b16 %v471
    %v607 = vunpack.c.l.b16 %v472
    %v608 = vunpack.c.l.b16 %v473
    %v609 = vunpack.c.l.b16 %v474
    %v610 = vunpack.c.l.b16 %v475
    %v611 = vunpack.c.l.b16 %v476
    %v612 = vunpack.c.l.b16 %v477
    %v613 = vunpack.c.l.b16 %v478
    %v614 = vunpack.c.l.b16 %v479
    %v615 = vunpack.c.l.b16 %v480
    %v616 = vunpack.c.l.b16 %v481
    %v617 = vunpack.c.l.b16 %v482
    %v618 = vunpack.c.l.b16 %v483
    %v619 = vpack.c.b16 %v556, %v555
    %v620 = vpack.c.b16 %v558, %v557
    %v621 = vpack.c.b16 %v560, %v559
    %v622 = vpack.c.b16 %v562, %v561
    %v623 = vpack.c.b16 %v564, %v563
    %v624 = vpack.c.b16 %v566, %v565
    %v625 = vpack.c.b16 %v568, %v567
    %v626 = vpack.c.b16 %v570, %v569
    %v627 = vpack.c.b16 %v572, %v571
    %v628 = vpack.c.b16 %v574, %v573
    %v629 = vpack.c.b16 %v576, %v575
    %v630 = vpack.c.b16 %v578, %v577
    %v631 = vpack.c.b16 %v580, %v579
    %v632 = vpack.c.b16 %v582, %v581
    %v633 = vpack.c.b16 %v584, %v583
    %v634 = vpack.c.b16 %v586, %v585
    %v635 = vpack.c.b16 %v588, %v587
    %v636 = vpack.c.b16 %v590, %v589
    %v637 = vpack.c.b16 %v592, %v591
    %v638 = vpack.c.b16 %v594, %v593
    %v639 = vpack.c.b16 %v596, %v595
    %v640 = vpack.c.b16 %v598, %v597
    %v641 = vpack.c.b16 %v600, %v599
    %v642 = vpack.c.b16 %v602, %v601
    %v643 = vpack.c.b16 %v604, %v603
    %v644 = vpack.c.b16 %v606, %v605
    %v645 = vpack.c.b16 %v608, %v607
    %v646 = vpack.c.b16 %v610, %v609
    %v647 = vpack.c.b16 %v612, %v611
    %v648 = vpack.c.b16 %v614, %v613
    %v649 = vpack.c.b16 %v616, %v615
    %v650 = vpack.c.b16 %v618, %v617
    %683 = vmatprep.subr.bf16.mxu0 0
    %684 = vmatpush1.bf16.msra.mxu0 %v626
    %685 = vmatprep.subr.bf16.mxu0 0
    %686 = vmatpush1.bf16.msra.mxu0 %v625
    %687 = vmatprep.subr.bf16.mxu0 0
    %688 = vmatpush1.bf16.msra.mxu0 %v624
    %689 = vmatprep.subr.bf16.mxu0 0
    %690 = vmatpush1.bf16.msra.mxu0 %v623
    %691 = vmatprep.subr.bf16.mxu0 0
    %692 = vmatpush1.bf16.msra.mxu0 %v622
    %693 = vmatprep.subr.bf16.mxu0 0
    %694 = vmatpush1.bf16.msra.mxu0 %v621
    %695 = vmatprep.subr.bf16.mxu0 0
    %696 = vmatpush1.bf16.msra.mxu0 %v620
    %697 = vmatprep.subr.bf16.mxu0 0
    %698 = vmatpush1.bf16.msra.mxu0 %v619
    %699 = vmatprep.subr.bf16.mxu0 0
    %700 = vmatpush2.bf16.msra.mxu0 %v634
    %701 = vmatprep.subr.bf16.mxu0 0
    %702 = vmatpush2.bf16.msra.mxu0 %v633
    %703 = vmatprep.subr.bf16.mxu0 0
    %704 = vmatpush2.bf16.msra.mxu0 %v632
    %705 = vmatprep.subr.bf16.mxu0 0
    %706 = vmatpush2.bf16.msra.mxu0 %v631
    %707 = vmatprep.subr.bf16.mxu0 0
    %708 = vmatpush2.bf16.msra.mxu0 %v630
    %709 = vmatprep.subr.bf16.mxu0 0
    %710 = vmatpush2.bf16.msra.mxu0 %v629
    %711 = vmatprep.subr.bf16.mxu0 0
    %712 = vmatpush2.bf16.msra.mxu0 %v628
    %713 = vmatprep.subr.bf16.mxu0 0
    %714 = vmatpush2.bf16.msra.mxu0 %v627
    %715 = vmatprep.mubr.bf16.mxu0 %v417
    %716 = vmatmul.mubr.bf16.gmra.mxu0 %v416
    %v717 = vpop.f32.mrf.mxu0
    %v718 = vadd.f32 %v489, %v717
    %v719 = vpop.f32.mrf.mxu0
    %v720 = vpop.f32.mrf.mxu0
    %v721 = vadd.f32 %v489, %v720
    %v722 = vpop.f32.mrf.mxu0
    %723 = vdwg.mxu0
    %724 = vmatprep.subr.bf16.mxu0 0
    %725 = vmatpush1.bf16.msra.mxu0 %v642
    %726 = vmatprep.subr.bf16.mxu0 0
    %727 = vmatpush1.bf16.msra.mxu0 %v641
    %728 = vmatprep.subr.bf16.mxu0 0
    %729 = vmatpush1.bf16.msra.mxu0 %v640
    %730 = vmatprep.subr.bf16.mxu0 0
    %731 = vmatpush1.bf16.msra.mxu0 %v639
    %732 = vmatprep.subr.bf16.mxu0 0
    %733 = vmatpush1.bf16.msra.mxu0 %v638
    %734 = vmatprep.subr.bf16.mxu0 0
    %735 = vmatpush1.bf16.msra.mxu0 %v637
    %736 = vmatprep.subr.bf16.mxu0 0
    %737 = vmatpush1.bf16.msra.mxu0 %v636
    %738 = vmatprep.subr.bf16.mxu0 0
    %739 = vmatpush1.bf16.msra.mxu0 %v635
    %740 = vmatprep.subr.bf16.mxu0 0
    %741 = vmatpush2.bf16.msra.mxu0 %v650
    %742 = vmatprep.subr.bf16.mxu0 0
    %743 = vmatpush2.bf16.msra.mxu0 %v649
    %744 = vmatprep.subr.bf16.mxu0 0
    %745 = vmatpush2.bf16.msra.mxu0 %v648
    %746 = vmatprep.subr.bf16.mxu0 0
    %747 = vmatpush2.bf16.msra.mxu0 %v647
    %748 = vmatprep.subr.bf16.mxu0 0
    %749 = vmatpush2.bf16.msra.mxu0 %v646
    %750 = vmatprep.subr.bf16.mxu0 0
    %751 = vmatpush2.bf16.msra.mxu0 %v645
    %752 = vmatprep.subr.bf16.mxu0 0
    %753 = vmatpush2.bf16.msra.mxu0 %v644
    %754 = vmatprep.subr.bf16.mxu0 0
    %755 = vmatpush2.bf16.msra.mxu0 %v643
    %756 = vmatprep.mubr.bf16.mxu0 %v419
    %757 = vmatmul.mubr.bf16.gmra.mxu0 %v418
    %v758 = vpop.f32.mrf.mxu0
    %v759 = vadd.f32 %v718, %v758
    %v760 = vpop.f32.mrf.mxu0
    %v761 = vpop.f32.mrf.mxu0
    %v762 = vadd.f32 %v721, %v761
    %v763 = vpop.f32.mrf.mxu0
    %764 = vdwg.mxu0
    %v765 = vpack.c.bf16 %v762, %v759
    %v767 = vunpack.c.l.b16 %v765
    %v768 = vunpack.c.h.b16 %v765
    %v769 = vpack.c.b16 %v767, %v767
    %v770 = vpack.c.b16 %v768, %v768
    %773 = vst [vmem:[%s9] sm:$0xf] %v769
    %774 = vst [vmem:[%s9 + $0x4] sm:$0xf] %v770
    // Predicated region
    $region46: #{qnetwork_forward.1} parent=1 // pred_check
      _
    $region47: #{qnetwork_forward.1} parent=1 // pred_check_branch
      %776 = sbr.rel (0) target = $region49
    $region48: #{qnetwork_forward.1} parent=1 // pred_region
      _
    $region49: #{qnetwork_forward.1} parent=1 // pred_fallthru
      _
    // Predicated region
    $region50: #{qnetwork_forward.1} parent=1 // pred_check
      _
    $region51: #{qnetwork_forward.1} parent=1 // pred_check_branch
      %778 = sbr.rel (0) target = $region53
    $region52: #{qnetwork_forward.1} parent=1 // pred_region
      _
    $region53: #{qnetwork_forward.1} parent=1 // pred_fallthru
      _
    %779 = vsyncpa [#allocation3], 1
    %780 = vsyncpa [#allocation5], 1

</llo_original>
